<compile_context>
chip_gen: v7x
topology: tpu7x:2x2x1
jax: 0.10.0
libtpu: 0.0.40
codegen_flags: <defaults>
</compile_context>

<pallas_src>
import functools

import jax
import jax.numpy as jnp
from jax.experimental import pallas as pl
from jax.experimental.pallas import tpu as pltpu


def _round_up(n: int, m: int) -> int:
    return ((n + m - 1) // m) * m


def net_kernel(pooled_ref, w1_ref, b1_ref, w2_ref, b2_ref, out_ref):
    """Fused fc1 + relu + fc2 + log_softmax on one batch tile.

    pooled_ref: (TB, 196)  max-pooled & flattened activations
    w1_ref    : (196, 32)  fc1 weight, (in, out) layout
    b1_ref    : (1, 32)
    w2_ref    : (32, 10)   fc2 weight, (in, out) layout
    b2_ref    : (1, 10)
    out_ref   : (TB, 10)   log-probabilities
    """
    pooled = pooled_ref[...]                                    # (TB, 196)

    # fc1 + relu (MXU matmul, f32 accumulation)
    h = jnp.dot(pooled, w1_ref[...],
                preferred_element_type=jnp.float32) + b1_ref[...]
    h = jnp.maximum(h, 0.0)                                     # (TB, 32)

    # fc2
    logits = jnp.dot(h, w2_ref[...],
                     preferred_element_type=jnp.float32) + b2_ref[...]  # (TB, 10)

    # log_softmax along classes (dim=1), max-shifted for stability
    m = jnp.max(logits, axis=1, keepdims=True)
    s = logits - m
    lse = jnp.log(jnp.sum(jnp.exp(s), axis=1, keepdims=True))
    out_ref[...] = s - lse


@functools.partial(jax.jit, static_argnames=("block_b",))
def net_forward(x, w1, b1, w2, b2, *, block_b: int = 2048):
    """x: (B, 1, 28, 28) float32 NCHW. Returns (B, 10) log-probabilities."""
    B = x.shape[0]
    assert x.shape[1:] == (1, 28, 28), "Net expects (B, 1, 28, 28) inputs"
    x = x.astype(jnp.float32)

    # max_pool2d(2) + flatten(1) as one XLA reduce fusion over a FREE reshape
    # (no transpose, no extra HBM round-trip of a full-size copy).
    # Flattening order (c=1, i, j) matches torch.flatten(x, 1) on the pooled map.
    pooled = jnp.max(x.reshape(B, 14, 2, 14, 2), axis=(2, 4)).reshape(B, 196)

    # Batch tiling: TB is a multiple of 8 (sublane constraint); pad B up to a
    # whole number of tiles so every block is full (padded rows are masked off
    # by slicing the result; their log_softmax is finite so no NaN hazard).
    TB = _round_up(min(block_b, _round_up(B, 8)), 8)
    B_pad = _round_up(B, TB)
    if B_pad != B:
        pooled = jnp.pad(pooled, ((0, B_pad - B), (0, 0)))
    grid = (B_pad // TB,)

    out = pl.pallas_call(
        net_kernel,
        out_shape=jax.ShapeDtypeStruct((B_pad, 10), jnp.float32),
        grid=grid,
        in_specs=[
            # activations: tiled over batch, double-buffered by the pipeline
            pl.BlockSpec((TB, 196), lambda i: (i, 0)),
            # weights / biases: constant block index -> DMA'd once, stay in VMEM
            pl.BlockSpec((196, 32), lambda i: (0, 0)),
            pl.BlockSpec((1, 32), lambda i: (0, 0)),
            pl.BlockSpec((32, 10), lambda i: (0, 0)),
            pl.BlockSpec((1, 10), lambda i: (0, 0)),
        ],
        out_specs=pl.BlockSpec((TB, 10), lambda i: (i, 0)),
        compiler_params=pltpu.CompilerParams(
            dimension_semantics=("parallel",),   # megacore sharding on v7x
        ),
    )(pooled, w1, b1, w2, b2)

    return out[:B] if B_pad != B else out


def init_params(key):
    """Deterministic init mimicking nn.Linear's U(-1/sqrt(fan_in), 1/sqrt(fan_in))."""
    k1, k2, k3, k4 = jax.random.split(key, 4)
    bnd1 = 1.0 / jnp.sqrt(196.0)
    bnd2 = 1.0 / jnp.sqrt(32.0)
    w1 = jax.random.uniform(k1, (196, 32), jnp.float32, -bnd1, bnd1)  # fc1.weight.T
    b1 = jax.random.uniform(k2, (1, 32), jnp.float32, -bnd1, bnd1)    # fc1.bias
    w2 = jax.random.uniform(k3, (32, 10), jnp.float32, -bnd2, bnd2)   # fc2.weight.T
    b2 = jax.random.uniform(k4, (1, 10), jnp.float32, -bnd2, bnd2)    # fc2.bias
    return w1, b1, w2, b2


def net_reference(x, w1, b1, w2, b2):
    """Pure-JAX reference of the PyTorch forward, for correctness checking."""
    B = x.shape[0]
    pooled = jnp.max(x.reshape(B, 1, 14, 2, 14, 2), axis=(3, 5))     # max_pool2d(2)
    flat = pooled.reshape(B, -1)                                      # flatten(1)
    h = jnp.maximum(flat @ w1 + b1, 0.0)                              # fc1 + relu
    logits = h @ w2 + b2                                              # fc2
    return jax.nn.log_softmax(logits, axis=1)                         # log_softmax


if __name__ == "__main__":
    key = jax.random.PRNGKey(0)
    kx, kp = jax.random.split(key)
    w1, b1, w2, b2 = init_params(kp)

    # Small deterministic smoke test: batch=2, MNIST-like (1, 28, 28) => 196 pooled.
    x = jax.random.normal(kx, (2, 1, 28, 28), dtype=jnp.float32)
    out = jax.block_until_ready(net_forward(x, w1, b1, w2, b2))
    ref = net_reference(x, w1, b1, w2, b2)
    assert out.shape == (2, 10)
    assert jnp.allclose(out, ref, atol=1e-5, rtol=1e-5), "mismatch vs reference (B=2)"

    # Exercise the real pipelined path: several grid steps, batch not divisible
    # by the tile (padding), weights resident across steps.
    x2 = jax.random.normal(kx, (160, 1, 28, 28), dtype=jnp.float32)
    out2 = jax.block_until_ready(net_forward(x2, w1, b1, w2, b2, block_b=64))
    ref2 = net_reference(x2, w1, b1, w2, b2)
    assert out2.shape == (160, 10)
    assert jnp.allclose(out2, ref2, atol=1e-5, rtol=1e-5), "mismatch vs reference (B=160)"

    print("KERNEL_OK")
</pallas_src>

<mosaic_0001>
module attributes {stable_mosaic.version = 11 : i64} {
  func.func @net_kernel(%arg0: i32, %arg1: memref<8x196xf32, #tpu.memory_space<vmem>>, %arg2: memref<196x32xf32, #tpu.memory_space<vmem>>, %arg3: memref<1x32xf32, #tpu.memory_space<vmem>>, %arg4: memref<32x10xf32, #tpu.memory_space<vmem>>, %arg5: memref<1x10xf32, #tpu.memory_space<vmem>>, %arg6: memref<8x10xf32, #tpu.memory_space<vmem>>) attributes {dimension_semantics = [#tpu.dimension_semantics<parallel>], iteration_bounds = array<i64: 1>, scalar_prefetch = 0 : i64, scratch_operands = 0 : i64, tpu.core_type = #tpu.core_type<tc>, window_params = [{transform_indices = @transform_0, window_bounds = array<i64: 8, 196>}, {pipeline_mode = #tpu.pipeline_mode<synchronous>, transform_indices = @transform_1, window_bounds = array<i64: 196, 32>}, {pipeline_mode = #tpu.pipeline_mode<synchronous>, transform_indices = @transform_2, window_bounds = array<i64: 1, 32>}, {pipeline_mode = #tpu.pipeline_mode<synchronous>, transform_indices = @transform_3, window_bounds = array<i64: 32, 10>}, {pipeline_mode = #tpu.pipeline_mode<synchronous>, transform_indices = @transform_4, window_bounds = array<i64: 1, 10>}, {transform_indices = @transform_5, window_bounds = array<i64: 8, 10>}]} {
    %c0 = arith.constant 0 : index
    %c0_0 = arith.constant 0 : index
    %0 = vector.load %arg1[%c0, %c0_0] : memref<8x196xf32, #tpu.memory_space<vmem>>, vector<8x196xf32>
    %c0_1 = arith.constant 0 : index
    %c0_2 = arith.constant 0 : index
    %1 = vector.load %arg2[%c0_1, %c0_2] : memref<196x32xf32, #tpu.memory_space<vmem>>, vector<196x32xf32>
    %cst = arith.constant dense<0.000000e+00> : vector<8x32xf32>
    %2 = tpu.matmul %0, %1, %cst {dimension_numbers = #tpu.dot_dimension_numbers<[1], [0], [0], [1], [0, 0, 1, 1], [], []>} : vector<8x196xf32>, vector<196x32xf32>, vector<8x32xf32> -> vector<8x32xf32>
    %c0_3 = arith.constant 0 : index
    %c0_4 = arith.constant 0 : index
    %3 = vector.load %arg3[%c0_3, %c0_4] : memref<1x32xf32, #tpu.memory_space<vmem>>, vector<1x32xf32>
    %4 = vector.broadcast %3 : vector<1x32xf32> to vector<8x32xf32>
    %5 = arith.addf %2, %4 : vector<8x32xf32>
    %cst_5 = arith.constant 0.000000e+00 : f32
    %6 = vector.broadcast %cst_5 : f32 to vector<8x32xf32>
    %7 = arith.maximumf %5, %6 : vector<8x32xf32>
    %c0_6 = arith.constant 0 : index
    %c0_7 = arith.constant 0 : index
    %8 = vector.load %arg4[%c0_6, %c0_7] : memref<32x10xf32, #tpu.memory_space<vmem>>, vector<32x10xf32>
    %cst_8 = arith.constant dense<0.000000e+00> : vector<8x10xf32>
    %9 = tpu.matmul %7, %8, %cst_8 {dimension_numbers = #tpu.dot_dimension_numbers<[1], [0], [0], [1], [0, 0, 1, 1], [], []>} : vector<8x32xf32>, vector<32x10xf32>, vector<8x10xf32> -> vector<8x10xf32>
    %c0_9 = arith.constant 0 : index
    %c0_10 = arith.constant 0 : index
    %10 = vector.load %arg5[%c0_9, %c0_10] : memref<1x10xf32, #tpu.memory_space<vmem>>, vector<1x10xf32>
    %11 = vector.broadcast %10 : vector<1x10xf32> to vector<8x10xf32>
    %12 = arith.addf %9, %11 : vector<8x10xf32>
    %cst_11 = arith.constant dense<0xFF800000> : vector<8xf32>
    %13 = vector.multi_reduction <maximumf>, %12, %cst_11 [1] : vector<8x10xf32> to vector<8xf32>
    %14 = vector.shape_cast %13 : vector<8xf32> to vector<8x1xf32>
    %15 = vector.broadcast %14 : vector<8x1xf32> to vector<8x10xf32>
    %16 = arith.subf %12, %15 : vector<8x10xf32>
    %17 = math.exp %16 : vector<8x10xf32>
    %cst_12 = arith.constant dense<0.000000e+00> : vector<8xf32>
    %18 = vector.multi_reduction <add>, %17, %cst_12 [1] : vector<8x10xf32> to vector<8xf32>
    %19 = vector.shape_cast %18 : vector<8xf32> to vector<8x1xf32>
    %20 = math.log %19 : vector<8x1xf32>
    %21 = vector.broadcast %20 : vector<8x1xf32> to vector<8x10xf32>
    %22 = arith.subf %16, %21 : vector<8x10xf32>
    %c0_13 = arith.constant 0 : index
    %c0_14 = arith.constant 0 : index
    %23 = vector.load %arg6[%c0_13, %c0_14] : memref<8x10xf32, #tpu.memory_space<vmem>>, vector<8x10xf32>
    tpu.vector_store %arg6[%c0_13, %c0_14], %22 {strides = array<i32>} : memref<8x10xf32, #tpu.memory_space<vmem>>, vector<8x10xf32>,
    return
  }
  func.func @transform_0(%arg0: i32) -> (i32, i32) {
    %c0_i32 = arith.constant 0 : i32
    %c0_i32_0 = arith.constant 0 : i32
    return %arg0, %c0_i32 : i32, i32
  }
  func.func @transform_1(%arg0: i32) -> (i32, i32) {
    %c0_i32 = arith.constant 0 : i32
    %c0_i32_0 = arith.constant 0 : i32
    %c0_i32_1 = arith.constant 0 : i32
    return %c0_i32, %c0_i32_0 : i32, i32
  }
  func.func @transform_2(%arg0: i32) -> (i32, i32) {
    %c0_i32 = arith.constant 0 : i32
    %c0_i32_0 = arith.constant 0 : i32
    %c0_i32_1 = arith.constant 0 : i32
    return %c0_i32, %c0_i32_0 : i32, i32
  }
  func.func @transform_3(%arg0: i32) -> (i32, i32) {
    %c0_i32 = arith.constant 0 : i32
    %c0_i32_0 = arith.constant 0 : i32
    %c0_i32_1 = arith.constant 0 : i32
    return %c0_i32, %c0_i32_0 : i32, i32
  }
  func.func @transform_4(%arg0: i32) -> (i32, i32) {
    %c0_i32 = arith.constant 0 : i32
    %c0_i32_0 = arith.constant 0 : i32
    %c0_i32_1 = arith.constant 0 : i32
    return %c0_i32, %c0_i32_0 : i32, i32
  }
  func.func @transform_5(%arg0: i32) -> (i32, i32) {
    %c0_i32 = arith.constant 0 : i32
    %c0_i32_0 = arith.constant 0 : i32
    return %arg0, %c0_i32 : i32, i32
  }
}

</mosaic_0001>

<llo_original>
// kernel: net_forward.1
$region0: #{net_forward.1}
  #allocation0 [shape = 'u32[]', space=smem, size = 0x4, offset = 0x4, fixed_abs, tag = 'smem constant byte address 0x4 - core index']
  #allocation1 [shape = 'u32[144,128]{1,0:T(1,128)}', space=vmem, size = 0x12000, scoped, tag = 'internal scratch']
  %s0 = inlined_call_operand.vmem [shape: f32[8,196], index: 0, kind: input, shape index: {}]
  %s1 = inlined_call_operand.vmem [shape: f32[196,32], index: 1, kind: input, shape index: {}]
  %s2 = inlined_call_operand.vmem [shape: f32[1,32], index: 2, kind: input, shape index: {}]
  %s3 = inlined_call_operand.vmem [shape: f32[32,10], index: 3, kind: input, shape index: {}]
  %s4 = inlined_call_operand.vmem [shape: f32[1,10], index: 4, kind: input, shape index: {}]
  %s5 = inlined_call_operand.vmem [shape: f32[8,10], index: 5, kind: output, shape index: {}]
  %s6 = sld [smem:[#allocation0]]
  $region30: #{net_forward.1} parent=0
    _
  %s8 = ssub.s32 1, %s6
  %s9 = scalar_select 0, %s8, %s6
  // Predicated region
  $region2: #{net_forward.1} parent=0 // pred_check
    _
  $region3: #{net_forward.1} parent=0 // pred_check_branch
    %11 = sbr.rel (0) target = $region5
  $region4: #{net_forward.1} parent=0 // pred_region
    _
  $region5: #{net_forward.1} parent=0 // pred_fallthru
    _
  // Predicated region
  $region6: #{net_forward.1} parent=0 // pred_check
    _
  $region7: #{net_forward.1} parent=0 // pred_check_branch
    %13 = sbr.rel (0) target = $region9
  $region8: #{net_forward.1} parent=0 // pred_region
    _
  $region9: #{net_forward.1} parent=0 // pred_fallthru
    _
  // Predicated region
  $region10: #{net_forward.1} parent=0 // pred_check
    _
  $region11: #{net_forward.1} parent=0 // pred_check_branch
    %15 = sbr.rel (0) target = $region13
  $region12: #{net_forward.1} parent=0 // pred_region
    _
  $region13: #{net_forward.1} parent=0 // pred_fallthru
    _
  // Predicated region
  $region14: #{net_forward.1} parent=0 // pred_check
    _
  $region15: #{net_forward.1} parent=0 // pred_check_branch
    %17 = sbr.rel (0) target = $region17
  $region16: #{net_forward.1} parent=0 // pred_region
    _
  $region17: #{net_forward.1} parent=0 // pred_fallthru
    _
  // Predicated region
  $region18: #{net_forward.1} parent=0 // pred_check
    _
  $region19: #{net_forward.1} parent=0 // pred_check_branch
    %19 = sbr.rel (0) target = $region21
  $region20: #{net_forward.1} parent=0 // pred_region
    _
  $region21: #{net_forward.1} parent=0 // pred_fallthru
    _
  %v20 = vld [vmem:[%s0] sm:$0xff]
  %v21 = vld [vmem:[%s0 + $0x8] sm:$0xff]
  %v22 = vld [vmem:[%s1] sm:$0xff]
  %v23 = vld [vmem:[%s1 + $0x8] sm:$0xff]
  %v24 = vld [vmem:[%s1 + $0x10] sm:$0xff]
  %v25 = vld [vmem:[%s1 + $0x18] sm:$0xff]
  %v26 = vld [vmem:[%s1 + $0x20] sm:$0xff]
  %v27 = vld [vmem:[%s1 + $0x28] sm:$0xff]
  %v28 = vld [vmem:[%s1 + $0x30] sm:$0xff]
  %v29 = vld [vmem:[%s1 + $0x38] sm:$0xff]
  %v30 = vld [vmem:[%s1 + $0x40] sm:$0xff]
  %v31 = vld [vmem:[%s1 + $0x48] sm:$0xff]
  %v32 = vld [vmem:[%s1 + $0x50] sm:$0xff]
  %v33 = vld [vmem:[%s1 + $0x58] sm:$0xff]
  %v34 = vld [vmem:[%s1 + $0x60] sm:$0xff]
  %v35 = vld [vmem:[%s1 + $0x68] sm:$0xff]
  %v36 = vld [vmem:[%s1 + $0x70] sm:$0xff]
  %v37 = vld [vmem:[%s1 + $0x78] sm:$0xff]
  %v38 = vld [vmem:[%s1 + $0x80] sm:$0xff]
  %v39 = vld [vmem:[%s1 + $0x88] sm:$0xff]
  %v40 = vld [vmem:[%s1 + $0x90] sm:$0xff]
  %v41 = vld [vmem:[%s1 + $0x98] sm:$0xff]
  %v42 = vld [vmem:[%s1 + $0xa0] sm:$0xff]
  %v43 = vld [vmem:[%s1 + $0xa8] sm:$0xff]
  %v44 = vld [vmem:[%s1 + $0xb0] sm:$0xff]
  %v45 = vld [vmem:[%s1 + $0xb8] sm:$0xff]
  %v46 = vld [vmem:[%s1 + $0xc0] sm:$0xf]
  %v47 = vld [vmem:[%s2] sm:$0x1]
  %v49 = vlaneseq
  %v50 = vshrl.u32 %v49, 7
  %v51 = vsub.s32 0, %v50
  %v52 = vrot.slane %v47, %v51
  %vm54 = vcmask 556032
  %v56 = vsel %vm54, %v21, 0
  %vm58 = vcmask 1043456
  %v60 = vsel %vm58, %v46, 0
  %62 = vmatprep.subr.mxu0 0.0
  %63 = vmatpush1.msra.mxu0 %v22
  %64 = vmatprep.subr.mxu0 0.0
  %65 = vmatpush1.msra.mxu0 %v23
  %66 = vmatprep.subr.mxu0 0.0
  %67 = vmatpush1.msra.mxu0 %v24
  %68 = vmatprep.subr.mxu0 0.0
  %69 = vmatpush1.msra.mxu0 %v25
  %70 = vmatprep.subr.mxu0 0.0
  %71 = vmatpush1.msra.mxu0 %v26
  %72 = vmatprep.subr.mxu0 0.0
  %73 = vmatpush1.msra.mxu0 %v27
  %74 = vmatprep.subr.mxu0 0.0
  %75 = vmatpush1.msra.mxu0 %v28
  %76 = vmatprep.subr.mxu0 0.0
  %77 = vmatpush1.msra.mxu0 %v29
  %78 = vmatprep.subr.mxu0 0.0
  %79 = vmatpush1.msra.mxu0 %v30
  %80 = vmatprep.subr.mxu0 0.0
  %81 = vmatpush1.msra.mxu0 %v31
  %82 = vmatprep.subr.mxu0 0.0
  %83 = vmatpush1.msra.mxu0 %v32
  %84 = vmatprep.subr.mxu0 0.0
  %85 = vmatpush1.msra.mxu0 %v33
  %86 = vmatprep.subr.mxu0 0.0
  %87 = vmatpush1.msra.mxu0 %v34
  %88 = vmatprep.subr.mxu0 0.0
  %89 = vmatpush1.msra.mxu0 %v35
  %90 = vmatprep.subr.mxu0 0.0
  %91 = vmatpush1.msra.mxu0 %v36
  %92 = vmatprep.subr.mxu0 0.0
  %93 = vmatpush1.msra.mxu0 %v37
  %94 = vmatprep.subr.mxu0 0.0
  %95 = vmatpush1.msra.mxu0 %v38
  %96 = vmatprep.subr.mxu0 0.0
  %97 = vmatpush1.msra.mxu0 %v39
  %98 = vmatprep.subr.mxu0 0.0
  %99 = vmatpush1.msra.mxu0 %v40
  %100 = vmatprep.subr.mxu0 0.0
  %101 = vmatpush1.msra.mxu0 %v41
  %102 = vmatprep.subr.mxu0 0.0
  %103 = vmatpush1.msra.mxu0 %v42
  %104 = vmatprep.subr.mxu0 0.0
  %105 = vmatpush1.msra.mxu0 %v43
  %106 = vmatprep.subr.mxu0 0.0
  %107 = vmatpush1.msra.mxu0 %v44
  %108 = vmatprep.subr.mxu0 0.0
  %109 = vmatpush1.msra.mxu0 %v45
  %110 = vmatprep.subr.mxu0 0.0
  %111 = vmatpush1.msra.mxu0 %v60
  %112 = vmatprep.subr.mxu0 0.0
  %113 = vmatpush1.msra.mxu0 0.0
  %114 = vmatprep.subr.mxu0 0.0
  %115 = vmatpush1.msra.mxu0 0.0
  %116 = vmatprep.subr.mxu0 0.0
  %117 = vmatpush1.msra.mxu0 0.0
  %118 = vmatprep.subr.mxu0 0.0
  %119 = vmatpush1.msra.mxu0 0.0
  %120 = vmatprep.subr.mxu0 0.0
  %121 = vmatpush1.msra.mxu0 0.0
  %122 = vmatprep.subr.mxu0 0.0
  %123 = vmatpush1.msra.mxu0 0.0
  %124 = vmatprep.subr.mxu0 0.0
  %125 = vmatpush1.msra.mxu0 0.0
  %126 = vmatprep.mubr.f32.mxu0 %v56
  %127 = vmatmul.mubr.f32.gmra.mrb[0].mxu0 %v20
  %v128 = vpop.f32.mrb[0].mxu0
  %v129 = vadd.f32 %v52, %v128
  %v130 = vpop.f32.mrb[0].mxu0
  %131 = vdwg.mxu0
  %v132 = vmax.f32 %v129, 0.0
  %v133 = vld [vmem:[%s3] sm:$0xff]
  %v134 = vld [vmem:[%s3 + $0x8] sm:$0xff]
  %v135 = vld [vmem:[%s3 + $0x10] sm:$0xff]
  %v136 = vld [vmem:[%s3 + $0x18] sm:$0xff]
  %v137 = vld [vmem:[%s4] sm:$0x1]
  %v139 = vlaneseq
  %v140 = vshrl.u32 %v139, 7
  %v141 = vsub.s32 0, %v140
  %v142 = vrot.slane %v137, %v141
  %vm144 = vcmask 261120
  %v146 = vsel %vm144, %v132, 0
  %148 = vmatprep.subr.mxu0 0.0
  %149 = vmatpush1.msra.mxu0 %v133
  %150 = vmatprep.subr.mxu0 0.0
  %151 = vmatpush1.msra.mxu0 %v134
  %152 = vmatprep.subr.mxu0 0.0
  %153 = vmatpush1.msra.mxu0 %v135
  %154 = vmatprep.subr.mxu0 0.0
  %155 = vmatpush1.msra.mxu0 %v136
  %156 = vmatprep.subr.mxu0 0.0
  %157 = vmatpush1.msra.mxu0 0.0
  %158 = vmatprep.subr.mxu0 0.0
  %159 = vmatpush1.msra.mxu0 0.0
  %160 = vmatprep.subr.mxu0 0.0
  %161 = vmatpush1.msra.mxu0 0.0
  %162 = vmatprep.subr.mxu0 0.0
  %163 = vmatpush1.msra.mxu0 0.0
  %164 = vmatprep.subr.mxu0 0.0
  %165 = vmatpush1.msra.mxu0 0.0
  %166 = vmatprep.subr.mxu0 0.0
  %167 = vmatpush1.msra.mxu0 0.0
  %168 = vmatprep.subr.mxu0 0.0
  %169 = vmatpush1.msra.mxu0 0.0
  %170 = vmatprep.subr.mxu0 0.0
  %171 = vmatpush1.msra.mxu0 0.0
  %172 = vmatprep.subr.mxu0 0.0
  %173 = vmatpush1.msra.mxu0 0.0
  %174 = vmatprep.subr.mxu0 0.0
  %175 = vmatpush1.msra.mxu0 0.0
  %176 = vmatprep.subr.mxu0 0.0
  %177 = vmatpush1.msra.mxu0 0.0
  %178 = vmatprep.subr.mxu0 0.0
  %179 = vmatpush1.msra.mxu0 0.0
  %180 = vmatprep.subr.mxu0 0.0
  %181 = vmatpush1.msra.mxu0 0.0
  %182 = vmatprep.subr.mxu0 0.0
  %183 = vmatpush1.msra.mxu0 0.0
  %184 = vmatprep.subr.mxu0 0.0
  %185 = vmatpush1.msra.mxu0 0.0
  %186 = vmatprep.subr.mxu0 0.0
  %187 = vmatpush1.msra.mxu0 0.0
  %188 = vmatprep.subr.mxu0 0.0
  %189 = vmatpush1.msra.mxu0 0.0
  %190 = vmatprep.subr.mxu0 0.0
  %191 = vmatpush1.msra.mxu0 0.0
  %192 = vmatprep.subr.mxu0 0.0
  %193 = vmatpush1.msra.mxu0 0.0
  %194 = vmatprep.subr.mxu0 0.0
  %195 = vmatpush1.msra.mxu0 0.0
  %196 = vmatprep.subr.mxu0 0.0
  %197 = vmatpush1.msra.mxu0 0.0
  %198 = vmatprep.subr.mxu0 0.0
  %199 = vmatpush1.msra.mxu0 0.0
  %200 = vmatprep.subr.mxu0 0.0
  %201 = vmatpush1.msra.mxu0 0.0
  %202 = vmatprep.subr.mxu0 0.0
  %203 = vmatpush1.msra.mxu0 0.0
  %204 = vmatprep.subr.mxu0 0.0
  %205 = vmatpush1.msra.mxu0 0.0
  %206 = vmatprep.subr.mxu0 0.0
  %207 = vmatpush1.msra.mxu0 0.0
  %208 = vmatprep.subr.mxu0 0.0
  %209 = vmatpush1.msra.mxu0 0.0
  %210 = vmatprep.subr.mxu0 0.0
  %211 = vmatpush1.msra.mxu0 0.0
  %212 = vmatprep.mubr.f32.mxu0 0.0
  %213 = vmatmul.mubr.f32.gmra.mrb[0].mxu0 %v146
  %v214 = vpop.f32.mrb[0].mxu0
  %v215 = vadd.f32 %v142, %v214
  %v216 = vpop.f32.mrb[0].mxu0
  %217 = vdwg.mxu0
  %vm218 = vcmask 80896
  %v219 = vsel %vm218, %v215, -inf
  %220 = vmax.xlane.f32.xlu0 %v219
  %v221 = vpop.xlane.xlu0 %220
  %v222 = vsub.f32 %v215, %v221
  %v223 = vmul.f32 %v222, 1.442695
  %v224 = vpow.pop %v223
  %v225 = vsel %vm218, %v224, 0.0
  %226 = vadd.xlane.f32.xlu0 %v225
  %v227 = vpop.xlane.xlu0 %226
  %v228 = vlog2.pop %v227
  %v229 = vmul.f32 %v228, 0.6931472
  %v230 = vsub.f32 %v222, %v229
  %231 = vst.msk [vmem:[%s5] sm:$0xff] %vm218, %v230
  // Predicated region
  $region22: #{net_forward.1} parent=0 // pred_check
    _
  $region23: #{net_forward.1} parent=0 // pred_check_branch
    %233 = sbr.rel (0) target = $region25
  $region24: #{net_forward.1} parent=0 // pred_region
    _
  $region25: #{net_forward.1} parent=0 // pred_fallthru
    _
  // Predicated region
  $region26: #{net_forward.1} parent=0 // pred_check
    _
  $region27: #{net_forward.1} parent=0 // pred_check_branch
    %235 = sbr.rel (0) target = $region29
  $region28: #{net_forward.1} parent=0 // pred_region
    _
  $region29: #{net_forward.1} parent=0 // pred_fallthru
    _

</llo_original>
